<compile_context>
chip_gen: v7x
topology: tpu7x:2x2x1
jax: 0.10.0
libtpu: 0.0.40
codegen_flags: <defaults>
</compile_context>

<pallas_src>
import jax
import jax.numpy as jnp
from jax.experimental import pallas as pl
from jax.experimental.pallas import tpu as pltpu


def _affine0d_kernel(scale_ref, x_ref, o_ref):
    # scale_ref: (1, S) f32 combined scale = weight + exp(bias) (resident)
    # x_ref:     (bm, S) block of input rows
    # o_ref:     (bm, S) block of output rows
    scale = scale_ref[...].astype(o_ref.dtype)   # (1, S); no-op cast for f32
    o_ref[...] = x_ref[...] * scale              # broadcast over rows (VPU)


def _round_up(a, b):
    return ((a + b - 1) // b) * b


def affine_transform_0d(x, weight, bias, *, block_rows=1024):
    """out = weight * x + exp(bias) * x, broadcasting over leading dims of x.

    x: (..., S) with S == weight.shape[-1] == bias.shape[-1].
    """
    S = x.shape[-1]
    lead = x.shape[:-1]
    x2 = x.reshape(-1, S)
    M = x2.shape[0]

    # Combined scale: tiny O(S) op in the wrapper; removes one resident input
    # stream and the per-step exp/add from the kernel body.
    scale = (weight.reshape(1, S).astype(jnp.float32)
             + jnp.exp(bias.reshape(1, S).astype(jnp.float32)))

    # Row-block size:
    #  * multiple of 8 (sublane) unless it covers the whole array,
    #  * big enough to amortize per-step overhead,
    #  * grid >= 2 when M allows it (v7x megacore sharding),
    #  * no padding: Pallas masks the ragged last block's stores.
    block_rows = max(8, _round_up(block_rows, 8))
    if M <= block_rows:
        if M < 16:
            bm = M                                   # single block == full array
        else:
            bm = min(block_rows, _round_up(pl.cdiv(M, 2), 8))  # >= 2 steps
    else:
        bm = block_rows
    grid = (pl.cdiv(M, bm),)

    itemsize = jnp.dtype(x.dtype).itemsize
    cost = pl.CostEstimate(
        flops=M * S,                                  # one multiply per element
        transcendentals=0,                            # exp hoisted to wrapper
        bytes_accessed=(2 * M * S) * itemsize + S * 4,
    )

    out = pl.pallas_call(
        _affine0d_kernel,
        out_shape=jax.ShapeDtypeStruct((M, S), x.dtype),
        grid=grid,
        in_specs=[
            pl.BlockSpec((1, S), lambda i: (0, 0)),   # combined scale (resident)
            pl.BlockSpec((bm, S), lambda i: (i, 0)),  # x row-block
        ],
        out_specs=pl.BlockSpec((bm, S), lambda i: (i, 0)),
        compiler_params=pltpu.CompilerParams(
            dimension_semantics=("parallel",)),
        cost_estimate=cost,
    )(scale, x2)

    return out.reshape(*lead, S)


def _affine0d_reference(x, weight, bias):
    """Pure-JAX reference matching the PyTorch forward exactly."""
    z = weight * x
    x = jnp.exp(bias) * x
    return z + x


if __name__ == "__main__":
    key = jax.random.PRNGKey(0)
    scale_dim = 512                      # module default
    kw, kb, kx1, kx2 = jax.random.split(key, 4)

    # The module initializes weight/bias to zeros; use random values so the
    # test exercises non-trivial math (zeros would reduce to out == x).
    weight = 0.1 * jax.random.normal(kw, (1, scale_dim), dtype=jnp.float32)
    bias = 0.1 * jax.random.normal(kb, (scale_dim,), dtype=jnp.float32)

    # Case 1: small 2-D batch (single full-array block).
    x1 = jax.random.normal(kx1, (8, scale_dim), dtype=jnp.float32)
    y1 = jax.block_until_ready(affine_transform_0d(x1, weight, bias))
    ref1 = _affine0d_reference(x1, weight, bias)
    assert y1.shape == x1.shape
    assert jnp.allclose(y1, ref1, atol=1e-5, rtol=1e-5), "mismatch (case 1)"

    # Case 2: leading dims with M=21 rows -> 2 grid steps, ragged (masked)
    # last block; exercises the no-pad / no-slice path.
    x2 = jax.random.normal(kx2, (3, 7, scale_dim), dtype=jnp.float32)
    y2 = jax.block_until_ready(affine_transform_0d(x2, weight, bias))
    ref2 = _affine0d_reference(x2, weight, bias)
    assert y2.shape == x2.shape
    assert jnp.allclose(y2, ref2, atol=1e-5, rtol=1e-5), "mismatch (case 2)"

    print("KERNEL_OK")
</pallas_src>

<mosaic_0001>
module attributes {stable_mosaic.version = 11 : i64} {
  func.func @_affine0d_kernel(%arg0: i32, %arg1: memref<1x512xf32, #tpu.memory_space<vmem>>, %arg2: memref<8x512xf32, #tpu.memory_space<vmem>>, %arg3: memref<8x512xf32, #tpu.memory_space<vmem>>) attributes {dimension_semantics = [#tpu.dimension_semantics<parallel>], iteration_bounds = array<i64: 1>, scalar_prefetch = 0 : i64, scratch_operands = 0 : i64, tpu.core_type = #tpu.core_type<tc>, window_params = [{pipeline_mode = #tpu.pipeline_mode<synchronous>, transform_indices = @transform_0, window_bounds = array<i64: 1, 512>}, {transform_indices = @transform_1, window_bounds = array<i64: 8, 512>}, {transform_indices = @transform_2, window_bounds = array<i64: 8, 512>}]} {
    %c0 = arith.constant 0 : index
    %c0_0 = arith.constant 0 : index
    %0 = vector.load %arg1[%c0, %c0_0] : memref<1x512xf32, #tpu.memory_space<vmem>>, vector<1x512xf32>
    %c0_1 = arith.constant 0 : index
    %c0_2 = arith.constant 0 : index
    %1 = vector.load %arg2[%c0_1, %c0_2] : memref<8x512xf32, #tpu.memory_space<vmem>>, vector<8x512xf32>
    %2 = vector.broadcast %0 : vector<1x512xf32> to vector<8x512xf32>
    %3 = arith.mulf %1, %2 : vector<8x512xf32>
    %c0_3 = arith.constant 0 : index
    %c0_4 = arith.constant 0 : index
    %4 = vector.load %arg3[%c0_3, %c0_4] : memref<8x512xf32, #tpu.memory_space<vmem>>, vector<8x512xf32>
    tpu.vector_store %arg3[%c0_3, %c0_4], %3 {strides = array<i32>} : memref<8x512xf32, #tpu.memory_space<vmem>>, vector<8x512xf32>,
    return
  }
  func.func @transform_0(%arg0: i32) -> (i32, i32) {
    %c0_i32 = arith.constant 0 : i32
    %c0_i32_0 = arith.constant 0 : i32
    %c0_i32_1 = arith.constant 0 : i32
    return %c0_i32, %c0_i32_0 : i32, i32
  }
  func.func @transform_1(%arg0: i32) -> (i32, i32) {
    %c0_i32 = arith.constant 0 : i32
    %c0_i32_0 = arith.constant 0 : i32
    return %arg0, %c0_i32 : i32, i32
  }
  func.func @transform_2(%arg0: i32) -> (i32, i32) {
    %c0_i32 = arith.constant 0 : i32
    %c0_i32_0 = arith.constant 0 : i32
    return %arg0, %c0_i32 : i32, i32
  }
}

</mosaic_0001>

<llo_original>
// kernel: tpu_custom_call.1
$region0: #{tpu_custom_call.1}
  #allocation0 [shape = 'u32[]', space=smem, size = 0x4, offset = 0x4, fixed_abs, tag = 'smem constant byte address 0x4 - core index']
  #allocation1 [shape = 'u32[144,128]{1,0:T(1,128)}', space=vmem, size = 0x12000, scoped, tag = 'internal scratch']
  %s0 = inlined_call_operand.hbm [shape: f32[1,512], index: 0, kind: input, shape index: {}]
  %s1 = inlined_call_operand.hbm [shape: f32[8,512], index: 1, kind: input, shape index: {}]
  %s2 = inlined_call_operand.hbm [shape: f32[8,512], index: 2, kind: output, shape index: {}]
  %s3 = sld [smem:[#allocation0]]
  $region26: #{tpu_custom_call.1} parent=0
    _
  %s5 = ssub.s32 1, %s3
  %s6 = scalar_select 0, %s5, %s3
  $region1: #{tpu_custom_call.1} parent=0
    #allocation2 [shape = 'u8[2048]{0}', space=vmem, size = 0x800, scoped, tag = 'input window, operand 0, single buffered']
    #allocation3 [shape = 's32[1]{0}', space=sflag, size = 0x4, scoped, tag = 'scoped memory for tpu_custom_call.1']
    #allocation4 [shape = 's32[1]{0}', space=sflag, size = 0x4, scoped, tag = 'scoped memory for tpu_custom_call.1']
    #allocation5 [shape = 'u8[16384]{0}', space=vmem, size = 0x4000, scoped, tag = 'input window, operand 1, single buffered']
    #allocation6 [shape = 's32[1]{0}', space=sflag, size = 0x4, scoped, tag = 'scoped memory for tpu_custom_call.1']
    #allocation7 [shape = 'u8[16384]{0}', space=vmem, size = 0x4000, scoped, tag = 'output window, operand 0, single buffered']
    %7 = vsyncpa [#allocation3], 0
    %8 = vsyncpa [#allocation6], 0
    %9 = vsyncpa [#allocation4], 0
    // Predicated region
    $region2: #{tpu_custom_call.1} parent=1 // pred_check
      _
    $region3: #{tpu_custom_call.1} parent=1 // pred_check_branch
      %11 = sbr.rel (0) target = $region5
    $region4: #{tpu_custom_call.1} parent=1 // pred_region
      %s13 = ssub.s32 64, 64
      %14 = vsyncadd [#allocation3], %s13
      %s16 = sshll.u32 [#allocation2], 4
      %s17 = int_to_ptr.vmem [resolvable:$true] %s16
      %19 = dma.hbm_to_vmem [thread:$0]  %s0, 64, %s17, [#allocation3]
    $region5: #{tpu_custom_call.1} parent=1 // pred_fallthru
      _
    // Predicated region
    $region6: #{tpu_custom_call.1} parent=1 // pred_check
      _
    $region7: #{tpu_custom_call.1} parent=1 // pred_check_branch
      %21 = sbr.rel (0) target = $region9
    $region8: #{tpu_custom_call.1} parent=1 // pred_region
      %s23 = ssub.s32 512, 512
      %24 = vsyncadd [#allocation6], %s23
      %s26 = sshll.u32 [#allocation5], 4
      %s27 = int_to_ptr.vmem [resolvable:$true] %s26
      %29 = dma.hbm_to_vmem [thread:$0]  %s1, 512, %s27, [#allocation6]
    $region9: #{tpu_custom_call.1} parent=1 // pred_fallthru
      _
    // Predicated region
    $region10: #{tpu_custom_call.1} parent=1 // pred_check
      _
    $region11: #{tpu_custom_call.1} parent=1 // pred_check_branch
      %31 = sbr.rel (0) target = $region13
    $region12: #{tpu_custom_call.1} parent=1 // pred_region
      %32 = dma.done [#allocation3], 64
    $region13: #{tpu_custom_call.1} parent=1 // pred_fallthru
      _
    // Predicated region
    $region14: #{tpu_custom_call.1} parent=1 // pred_check
      _
    $region15: #{tpu_custom_call.1} parent=1 // pred_check_branch
      %34 = sbr.rel (0) target = $region17
    $region16: #{tpu_custom_call.1} parent=1 // pred_region
      %35 = dma.done [#allocation6], 512
    $region17: #{tpu_custom_call.1} parent=1 // pred_fallthru
      _
    %v36 = vld [vmem:[#allocation2] sm:$0xf]
    %v37 = vld [vmem:[#allocation5] sm:$0xff]
    %v38 = vld [vmem:[#allocation5 + $0x8] sm:$0xff]
    %v39 = vld [vmem:[#allocation5 + $0x10] sm:$0xff]
    %v40 = vld [vmem:[#allocation5 + $0x18] sm:$0xff]
    %v42 = vlaneseq
    %v43 = vshrl.u32 %v42, 7
    %v44 = vsub.s32 0, %v43
    %v45 = vrot.slane %v36, %v44
    %v46 = vlaneseq
    %v47 = vshrl.u32 %v46, 7
    %v48 = vsub.s32 1, %v47
    %v49 = vrot.slane %v36, %v48
    %v50 = vlaneseq
    %v51 = vshrl.u32 %v50, 7
    %v52 = vsub.s32 2, %v51
    %v53 = vrot.slane %v36, %v52
    %v54 = vlaneseq
    %v55 = vshrl.u32 %v54, 7
    %v56 = vsub.s32 3, %v55
    %v57 = vrot.slane %v36, %v56
    %v62 = vmul.f32 %v37, %v45
    %v63 = vmul.f32 %v38, %v49
    %v64 = vmul.f32 %v39, %v53
    %v65 = vmul.f32 %v40, %v57
    %66 = vst [vmem:[#allocation7] sm:$0xff] %v62
    %67 = vst [vmem:[#allocation7 + $0x8] sm:$0xff] %v63
    %68 = vst [vmem:[#allocation7 + $0x10] sm:$0xff] %v64
    %69 = vst [vmem:[#allocation7 + $0x18] sm:$0xff] %v65
    // Predicated region
    $region18: #{tpu_custom_call.1} parent=1 // pred_check
      _
    $region19: #{tpu_custom_call.1} parent=1 // pred_check_branch
      %71 = sbr.rel (0) target = $region21
    $region20: #{tpu_custom_call.1} parent=1 // pred_region
      %s73 = ssub.s32 512, 512
      %74 = vsyncadd [#allocation4], %s73
      %s76 = sshll.u32 [#allocation7], 4
      %s77 = int_to_ptr.vmem [resolvable:$true] %s76
      %79 = dma.vmem_to_hbm [thread:$0]  %s77, 512, %s2, [#allocation4]
    $region21: #{tpu_custom_call.1} parent=1 // pred_fallthru
      _
    // Predicated region
    $region22: #{tpu_custom_call.1} parent=1 // pred_check
      _
    $region23: #{tpu_custom_call.1} parent=1 // pred_check_branch
      %81 = sbr.rel (0) target = $region25
    $region24: #{tpu_custom_call.1} parent=1 // pred_region
      %82 = dma.done [#allocation4], 512
    $region25: #{tpu_custom_call.1} parent=1 // pred_fallthru
      _
    %83 = vsyncpa [#allocation3], 1
    %84 = vsyncpa [#allocation6], 1
    %85 = vsyncpa [#allocation4], 1

</llo_original>
